<compile_context>
chip_gen: v7x
topology: tpu7x:2x2x1
jax: 0.10.0
libtpu: 0.0.40
codegen_flags: <defaults>
</compile_context>

<pallas_src>
import jax
import jax.numpy as jnp
from jax.experimental import pallas as pl
from jax.experimental.pallas import tpu as pltpu


# ----------------------------------------------------------------------------
# Static configuration
# ----------------------------------------------------------------------------
ENC_DIM = 16
FC_SIZE = 32
CHAN, Y, X = 8, 4, 4                                  # layers[0].get_input_dimensions()
CONV_LAYERS = [(8, 4, 2, 2, 0), (4, 1, 2, 2, 0)]      # (Cin, Cout, k, stride, out_pad)
OUT_C, OUT_H, OUT_W = 1, 16, 16
BN_EPS = 1e-5

# Derived intermediate-layer shapes
C1, H1, W1 = 4, 8, 8                                  # after ConvT #1
N1 = C1 * H1 * W1                                     # 256 lanes (NCHW-flat)
PER_CH = H1 * W1                                      # 64 lanes per channel
N_OUT = OUT_C * OUT_H * OUT_W                         # 256 lanes

# Row layout of the packed "wide" slab (lane width = 256):
R_W2C1 = 0                     # rows [0, 32)   : fused (Linear2 @ ConvT1) weight
R_B2C1 = FC_SIZE               # row  32        : fused (Linear2 @ ConvT1) bias
R_BC2 = R_B2C1 + 1             # row  33        : ConvT2 bias, broadcast per lane
R_BCAST = R_BC2 + 1            # rows [34, 38)  : channel -> lane 0/1 broadcast
R_WC2 = 40                     # rows [40, 296) : ConvT2 dense weight (8-aligned)
SLAB_ROWS = R_WC2 + N1         # 296


# ----------------------------------------------------------------------------
# Single fused Pallas kernel
# ----------------------------------------------------------------------------
def _decoder_kernel(z_ref, w1b1_ref, pool_ref, slab_ref, o_ref):
    f32 = jnp.float32
    B = z_ref.shape[0]

    # ---- Linear(enc, fc) + ReLU ---------------------------------------------
    h = jnp.dot(z_ref[...], w1b1_ref[0:ENC_DIM, :], preferred_element_type=f32)
    h = jnp.maximum(h + w1b1_ref[ENC_DIM:ENC_DIM + 1, :], 0.0)          # (B, 32)

    # ---- Linear(fc, chan*y*x) fused with ConvTranspose2d #1 -----------------
    # Both linear, no nonlinearity between -> single folded matmul.
    h1 = (jnp.dot(h, slab_ref[R_W2C1:R_W2C1 + FC_SIZE, :],
                  preferred_element_type=f32)
          + slab_ref[R_B2C1:R_B2C1 + 1, :])                             # (B, 256)

    # ---- BatchNorm2d (training-mode batch stats, biased var) + ReLU ---------
    # One pooling matmul for sum(x) and sum(x^2): stack [h1; h1*h1] on sublanes.
    hh = jnp.concatenate([h1, h1 * h1], axis=0)                         # (2B, 256)
    s = jnp.dot(hh, pool_ref[0:N1, :], preferred_element_type=f32)      # (2B, C1)
    inv_n = 1.0 / float(B * PER_CH)
    mean = jnp.sum(s[0:B, :], axis=0, keepdims=True) * inv_n            # (1, C1)
    ex2 = jnp.sum(s[B:2 * B, :], axis=0, keepdims=True) * inv_n         # (1, C1)
    # var = E[x^2] - E[x]^2: acceptable here; switch to a (x-mean)^2 pass if
    # activations ever grow large relative to their std.
    var = ex2 - mean * mean
    inv_std = jax.lax.rsqrt(var + BN_EPS)
    gamma = pool_ref[N1:N1 + 1, :]                                      # (1, C1)
    beta = pool_ref[N1 + 1:N1 + 2, :]                                   # (1, C1)
    scale_c = gamma * inv_std
    shift_c = beta - mean * scale_c
    # One broadcast matmul for both per-channel scale and shift (stacked).
    sl = jnp.dot(jnp.concatenate([scale_c, shift_c], axis=0),
                 slab_ref[R_BCAST:R_BCAST + C1, :],
                 preferred_element_type=f32)                            # (2, 256)
    h2 = jnp.maximum(h1 * sl[0:1, :] + sl[1:2, :], 0.0)                 # (B, 256)

    # ---- ConvTranspose2d #2 (dense matmul) + sigmoid -------------------------
    y = (jnp.dot(h2, slab_ref[R_WC2:R_WC2 + N1, :], preferred_element_type=f32)
         + slab_ref[R_BC2:R_BC2 + 1, :])                                # (B, 256)
    # Numerically stable sigmoid on the EUP: sigmoid(y) = 0.5*tanh(y/2) + 0.5,
    # guaranteed to stay in [0, 1].
    o_ref[...] = 0.5 * jnp.tanh(0.5 * y) + 0.5


# ----------------------------------------------------------------------------
# One-time weight preprocessing (outside the kernel / hot path)
# ----------------------------------------------------------------------------
def _expand_conv_transpose(w, h_in, w_in):
    """ConvTranspose2d (stride == kernel, padding=0, output_padding=0) as a
    dense matrix.  w: (Cin, Cout, kH, kW) PyTorch layout.  Returns We of shape
    (Cin*h_in*w_in, Cout*h_out*w_out) with NCHW-flat row/col ordering so that
    x_flat @ We == conv_transpose2d(x) flattened (bias excluded)."""
    cin, cout, kh, kw = w.shape
    h_out, w_out = h_in * kh, w_in * kw
    ci, iy, ix, co, ky, kx = jnp.meshgrid(
        jnp.arange(cin), jnp.arange(h_in), jnp.arange(w_in),
        jnp.arange(cout), jnp.arange(kh), jnp.arange(kw), indexing="ij")
    rows = (ci * h_in + iy) * w_in + ix
    cols = (co * h_out + iy * kh + ky) * w_out + (ix * kw + kx)
    vals = w[ci, co, ky, kx]
    we = jnp.zeros((cin * h_in * w_in, cout * h_out * w_out), w.dtype)
    return we.at[rows.reshape(-1), cols.reshape(-1)].set(vals.reshape(-1))


def prepare_operands(params):
    """Build the 3 packed kernel operands from PyTorch-layout parameters."""
    (_, c1_out, k1, _, _), (_, _, k2, _, _) = CONV_LAYERS
    conv1, conv2 = params["conv"]

    wc1 = _expand_conv_transpose(conv1["w"], Y, X)                     # (128, 256)
    bc1 = jnp.repeat(conv1["b"], H1 * W1)[None, :]                     # (1, 256)
    wc2 = _expand_conv_transpose(conv2["w"], H1, W1)                   # (256, 256)
    bc2 = jnp.repeat(conv2["b"], OUT_H * OUT_W)[None, :]               # (1, 256)

    # Fold Linear2 into ConvT1 (purely linear composition).
    w2c1 = params["w2"] @ wc1                                          # (32, 256)
    b2c1 = params["b2"][None, :] @ wc1 + bc1                           # (1, 256)

    # Per-channel pooling (sum over a channel's lane group) and its transpose
    # (broadcast a per-channel scalar back to its lane group).
    pool = jnp.repeat(jnp.eye(c1_out, dtype=jnp.float32), H1 * W1, axis=0)  # (256, 4)
    bcast = pool.T                                                     # (4, 256)

    # Packed operands (fewer DMA descriptors in the kernel prologue).
    w1b1 = jnp.concatenate(
        [params["w1"], params["b1"][None, :]], axis=0)                 # (17, 32)
    pool_slab = jnp.concatenate(
        [pool, conv1["gamma"][None, :], conv1["beta"][None, :]], axis=0)  # (258, 4)
    pad = jnp.zeros((R_WC2 - (R_BCAST + c1_out), wc2.shape[1]), jnp.float32)
    wide_slab = jnp.concatenate(
        [w2c1, b2c1, bc2, bcast, pad, wc2], axis=0)                    # (296, 256)
    assert wide_slab.shape == (SLAB_ROWS, N1)
    return [w1b1, pool_slab, wide_slab]


# ----------------------------------------------------------------------------
# Parameters (deterministic, matching the PyTorch init scheme)
# ----------------------------------------------------------------------------
def init_params(key):
    ks = jax.random.split(key, 4)
    params = {}
    # Linear1 (enc -> fc): kaiming normal, mode=fan_out, relu gain
    std1 = jnp.sqrt(2.0) / jnp.sqrt(float(FC_SIZE))
    params["w1"] = std1 * jax.random.normal(ks[0], (ENC_DIM, FC_SIZE), jnp.float32)
    params["b1"] = jnp.zeros((FC_SIZE,), jnp.float32)
    # Linear2 (fc -> chan*y*x): xavier normal
    out2 = CHAN * Y * X
    std2 = jnp.sqrt(2.0 / float(FC_SIZE + out2))
    params["w2"] = std2 * jax.random.normal(ks[1], (FC_SIZE, out2), jnp.float32)
    params["b2"] = jnp.zeros((out2,), jnp.float32)
    # ConvTranspose2d weights (Cin, Cout, kH, kW): kaiming normal, mode=fan_out
    # (PyTorch fan_out for this layout = Cin*kH*kW); BN gamma=1, beta=0.
    params["conv"] = []
    for idx, (cin, cout, k, _s, _op) in enumerate(CONV_LAYERS):
        fan_out = cin * k * k
        std = jnp.sqrt(2.0) / jnp.sqrt(float(fan_out))
        w = std * jax.random.normal(ks[2 + idx], (cin, cout, k, k), jnp.float32)
        params["conv"].append({
            "w": w,
            "b": jnp.zeros((cout,), jnp.float32),
            "gamma": jnp.ones((cout,), jnp.float32),
            "beta": jnp.zeros((cout,), jnp.float32),
        })
    return params


# ----------------------------------------------------------------------------
# Forward pass: one fused pallas_call + free reshape to NCHW
# ----------------------------------------------------------------------------
def decoder_forward(z, operands):
    B = z.shape[0]
    args = [z] + list(operands)
    in_specs = [pl.BlockSpec(a.shape, lambda i: (0, 0)) for a in args]
    out = pl.pallas_call(
        _decoder_kernel,
        grid=(1,),
        out_shape=jax.ShapeDtypeStruct((B, N_OUT), jnp.float32),
        in_specs=in_specs,
        out_specs=pl.BlockSpec((B, N_OUT), lambda i: (0, 0)),
        compiler_params=pltpu.CompilerParams(
            dimension_semantics=("arbitrary",)),
    )(*args)
    # Row-major reshape only (no data movement): (B, 256) -> (B, 1, 16, 16).
    return out.reshape(B, OUT_C, OUT_H, OUT_W)


if __name__ == "__main__":
    key = jax.random.PRNGKey(0)
    pkey, zkey = jax.random.split(key)
    params = init_params(pkey)
    operands = prepare_operands(params)          # one-time weight expansion/folding
    z = jax.random.normal(zkey, (2, ENC_DIM), jnp.float32)   # batch=2, enc_dim=16

    out = jax.jit(decoder_forward)(z, operands)
    out = jax.block_until_ready(out)

    assert out.shape == (2, 1, OUT_H, OUT_W), out.shape
    assert bool(jnp.all(jnp.isfinite(out)))
    assert bool(jnp.all((out >= 0.0) & (out <= 1.0)))   # sigmoid range
    print("KERNEL_OK")
</pallas_src>

<mosaic_0001>
module attributes {stable_mosaic.version = 11 : i64} {
  func.func @_decoder_kernel(%arg0: i32, %arg1: memref<2x16xf32, #tpu.memory_space<vmem>>, %arg2: memref<17x32xf32, #tpu.memory_space<vmem>>, %arg3: memref<258x4xf32, #tpu.memory_space<vmem>>, %arg4: memref<296x256xf32, #tpu.memory_space<vmem>>, %arg5: memref<2x256xf32, #tpu.memory_space<vmem>>) attributes {dimension_semantics = [#tpu.dimension_semantics<arbitrary>], iteration_bounds = array<i64: 1>, scalar_prefetch = 0 : i64, scratch_operands = 0 : i64, tpu.core_type = #tpu.core_type<tc>, window_params = [{pipeline_mode = #tpu.pipeline_mode<synchronous>, transform_indices = @transform_0, window_bounds = array<i64: 2, 16>}, {pipeline_mode = #tpu.pipeline_mode<synchronous>, transform_indices = @transform_1, window_bounds = array<i64: 17, 32>}, {pipeline_mode = #tpu.pipeline_mode<synchronous>, transform_indices = @transform_2, window_bounds = array<i64: 258, 4>}, {pipeline_mode = #tpu.pipeline_mode<synchronous>, transform_indices = @transform_3, window_bounds = array<i64: 296, 256>}, {pipeline_mode = #tpu.pipeline_mode<synchronous>, transform_indices = @transform_4, window_bounds = array<i64: 2, 256>}]} {
    %c0 = arith.constant 0 : index
    %c0_0 = arith.constant 0 : index
    %0 = vector.load %arg1[%c0, %c0_0] : memref<2x16xf32, #tpu.memory_space<vmem>>, vector<2x16xf32>
    %c0_1 = arith.constant 0 : index
    %c0_2 = arith.constant 0 : index
    %1 = vector.load %arg2[%c0_1, %c0_2] : memref<17x32xf32, #tpu.memory_space<vmem>>, vector<16x32xf32>
    %cst = arith.constant dense<0.000000e+00> : vector<2x32xf32>
    %2 = tpu.matmul %0, %1, %cst {dimension_numbers = #tpu.dot_dimension_numbers<[1], [0], [0], [1], [0, 0, 1, 1], [], []>} : vector<2x16xf32>, vector<16x32xf32>, vector<2x32xf32> -> vector<2x32xf32>
    %c16 = arith.constant 16 : index
    %c0_3 = arith.constant 0 : index
    %3 = vector.load %arg2[%c16, %c0_3] : memref<17x32xf32, #tpu.memory_space<vmem>>, vector<1x32xf32>
    %4 = vector.broadcast %3 : vector<1x32xf32> to vector<2x32xf32>
    %5 = arith.addf %2, %4 : vector<2x32xf32>
    %cst_4 = arith.constant 0.000000e+00 : f32
    %6 = vector.broadcast %cst_4 : f32 to vector<2x32xf32>
    %7 = arith.maximumf %5, %6 : vector<2x32xf32>
    %c0_5 = arith.constant 0 : index
    %c0_6 = arith.constant 0 : index
    %8 = vector.load %arg4[%c0_5, %c0_6] : memref<296x256xf32, #tpu.memory_space<vmem>>, vector<32x256xf32>
    %cst_7 = arith.constant dense<0.000000e+00> : vector<2x256xf32>
    %9 = tpu.matmul %7, %8, %cst_7 {dimension_numbers = #tpu.dot_dimension_numbers<[1], [0], [0], [1], [0, 0, 1, 1], [], []>} : vector<2x32xf32>, vector<32x256xf32>, vector<2x256xf32> -> vector<2x256xf32>
    %c32 = arith.constant 32 : index
    %c0_8 = arith.constant 0 : index
    %10 = vector.load %arg4[%c32, %c0_8] : memref<296x256xf32, #tpu.memory_space<vmem>>, vector<1x256xf32>
    %11 = vector.broadcast %10 : vector<1x256xf32> to vector<2x256xf32>
    %12 = arith.addf %9, %11 : vector<2x256xf32>
    %13 = arith.mulf %12, %12 : vector<2x256xf32>
    %14 = tpu.concatenate %12, %13 in 0 : vector<2x256xf32>, vector<2x256xf32> -> vector<4x256xf32>
    %c0_9 = arith.constant 0 : index
    %c0_10 = arith.constant 0 : index
    %15 = vector.load %arg3[%c0_9, %c0_10] : memref<258x4xf32, #tpu.memory_space<vmem>>, vector<256x4xf32>
    %cst_11 = arith.constant dense<0.000000e+00> : vector<4x4xf32>
    %16 = tpu.matmul %14, %15, %cst_11 {dimension_numbers = #tpu.dot_dimension_numbers<[1], [0], [0], [1], [0, 0, 1, 1], [], []>} : vector<4x256xf32>, vector<256x4xf32>, vector<4x4xf32> -> vector<4x4xf32>
    %17 = vector.extract_strided_slice %16 {offsets = [0, 0], sizes = [2, 4], strides = [1, 1]} : vector<4x4xf32> to vector<2x4xf32>
    %cst_12 = arith.constant dense<0.000000e+00> : vector<4xf32>
    %18 = vector.multi_reduction <add>, %17, %cst_12 [0] : vector<2x4xf32> to vector<4xf32>
    %19 = vector.shape_cast %18 : vector<4xf32> to vector<1x4xf32>
    %cst_13 = arith.constant 7.812500e-03 : f32
    %20 = vector.broadcast %cst_13 : f32 to vector<1x4xf32>
    %21 = arith.mulf %19, %20 : vector<1x4xf32>
    %22 = vector.extract_strided_slice %16 {offsets = [2, 0], sizes = [2, 4], strides = [1, 1]} : vector<4x4xf32> to vector<2x4xf32>
    %cst_14 = arith.constant dense<0.000000e+00> : vector<4xf32>
    %23 = vector.multi_reduction <add>, %22, %cst_14 [0] : vector<2x4xf32> to vector<4xf32>
    %24 = vector.shape_cast %23 : vector<4xf32> to vector<1x4xf32>
    %cst_15 = arith.constant 7.812500e-03 : f32
    %25 = vector.broadcast %cst_15 : f32 to vector<1x4xf32>
    %26 = arith.mulf %24, %25 : vector<1x4xf32>
    %27 = arith.mulf %21, %21 : vector<1x4xf32>
    %28 = arith.subf %26, %27 : vector<1x4xf32>
    %cst_16 = arith.constant 9.99999974E-6 : f32
    %29 = vector.broadcast %cst_16 : f32 to vector<1x4xf32>
    %30 = arith.addf %28, %29 : vector<1x4xf32>
    %31 = math.rsqrt %30 : vector<1x4xf32>
    %c256 = arith.constant 256 : index
    %c0_17 = arith.constant 0 : index
    %32 = vector.load %arg3[%c256, %c0_17] : memref<258x4xf32, #tpu.memory_space<vmem>>, vector<1x4xf32>
    %c257 = arith.constant 257 : index
    %c0_18 = arith.constant 0 : index
    %33 = vector.load %arg3[%c257, %c0_18] : memref<258x4xf32, #tpu.memory_space<vmem>>, vector<1x4xf32>
    %34 = arith.mulf %32, %31 : vector<1x4xf32>
    %35 = arith.mulf %21, %34 : vector<1x4xf32>
    %36 = arith.subf %33, %35 : vector<1x4xf32>
    %37 = tpu.concatenate %34, %36 in 0 : vector<1x4xf32>, vector<1x4xf32> -> vector<2x4xf32>
    %c34 = arith.constant 34 : index
    %c0_19 = arith.constant 0 : index
    %38 = vector.load %arg4[%c34, %c0_19] : memref<296x256xf32, #tpu.memory_space<vmem>>, vector<4x256xf32>
    %cst_20 = arith.constant dense<0.000000e+00> : vector<2x256xf32>
    %39 = tpu.matmul %37, %38, %cst_20 {dimension_numbers = #tpu.dot_dimension_numbers<[1], [0], [0], [1], [0, 0, 1, 1], [], []>} : vector<2x4xf32>, vector<4x256xf32>, vector<2x256xf32> -> vector<2x256xf32>
    %40 = vector.extract_strided_slice %39 {offsets = [0, 0], sizes = [1, 256], strides = [1, 1]} : vector<2x256xf32> to vector<1x256xf32>
    %41 = vector.broadcast %40 : vector<1x256xf32> to vector<2x256xf32>
    %42 = arith.mulf %12, %41 : vector<2x256xf32>
    %43 = vector.extract_strided_slice %39 {offsets = [1, 0], sizes = [1, 256], strides = [1, 1]} : vector<2x256xf32> to vector<1x256xf32>
    %44 = vector.broadcast %43 : vector<1x256xf32> to vector<2x256xf32>
    %45 = arith.addf %42, %44 : vector<2x256xf32>
    %cst_21 = arith.constant 0.000000e+00 : f32
    %46 = vector.broadcast %cst_21 : f32 to vector<2x256xf32>
    %47 = arith.maximumf %45, %46 : vector<2x256xf32>
    %c40 = arith.constant 40 : index
    %c0_22 = arith.constant 0 : index
    %48 = vector.load %arg4[%c40, %c0_22] : memref<296x256xf32, #tpu.memory_space<vmem>>, vector<256x256xf32>
    %cst_23 = arith.constant dense<0.000000e+00> : vector<2x256xf32>
    %49 = tpu.matmul %47, %48, %cst_23 {dimension_numbers = #tpu.dot_dimension_numbers<[1], [0], [0], [1], [0, 0, 1, 1], [], []>} : vector<2x256xf32>, vector<256x256xf32>, vector<2x256xf32> -> vector<2x256xf32>
    %c33 = arith.constant 33 : index
    %c0_24 = arith.constant 0 : index
    %50 = vector.load %arg4[%c33, %c0_24] : memref<296x256xf32, #tpu.memory_space<vmem>>, vector<1x256xf32>
    %51 = vector.broadcast %50 : vector<1x256xf32> to vector<2x256xf32>
    %52 = arith.addf %49, %51 : vector<2x256xf32>
    %cst_25 = arith.constant 5.000000e-01 : f32
    %53 = vector.broadcast %cst_25 : f32 to vector<2x256xf32>
    %54 = arith.mulf %53, %52 : vector<2x256xf32>
    %55 = math.tanh %54 : vector<2x256xf32>
    %cst_26 = arith.constant 5.000000e-01 : f32
    %56 = vector.broadcast %cst_26 : f32 to vector<2x256xf32>
    %57 = arith.mulf %56, %55 : vector<2x256xf32>
    %cst_27 = arith.constant 5.000000e-01 : f32
    %58 = vector.broadcast %cst_27 : f32 to vector<2x256xf32>
    %59 = arith.addf %57, %58 : vector<2x256xf32>
    %c0_28 = arith.constant 0 : index
    %c0_29 = arith.constant 0 : index
    %60 = vector.load %arg5[%c0_28, %c0_29] : memref<2x256xf32, #tpu.memory_space<vmem>>, vector<2x256xf32>
    tpu.vector_store %arg5[%c0_28, %c0_29], %59 {strides = array<i32>} : memref<2x256xf32, #tpu.memory_space<vmem>>, vector<2x256xf32>,
    return
  }
  func.func @transform_0(%arg0: i32) -> (i32, i32) {
    %c0_i32 = arith.constant 0 : i32
    %c0_i32_0 = arith.constant 0 : i32
    %c0_i32_1 = arith.constant 0 : i32
    return %c0_i32, %c0_i32_0 : i32, i32
  }
  func.func @transform_1(%arg0: i32) -> (i32, i32) {
    %c0_i32 = arith.constant 0 : i32
    %c0_i32_0 = arith.constant 0 : i32
    %c0_i32_1 = arith.constant 0 : i32
    return %c0_i32, %c0_i32_0 : i32, i32
  }
  func.func @transform_2(%arg0: i32) -> (i32, i32) {
    %c0_i32 = arith.constant 0 : i32
    %c0_i32_0 = arith.constant 0 : i32
    %c0_i32_1 = arith.constant 0 : i32
    return %c0_i32, %c0_i32_0 : i32, i32
  }
  func.func @transform_3(%arg0: i32) -> (i32, i32) {
    %c0_i32 = arith.constant 0 : i32
    %c0_i32_0 = arith.constant 0 : i32
    %c0_i32_1 = arith.constant 0 : i32
    return %c0_i32, %c0_i32_0 : i32, i32
  }
  func.func @transform_4(%arg0: i32) -> (i32, i32) {
    %c0_i32 = arith.constant 0 : i32
    %c0_i32_0 = arith.constant 0 : i32
    %c0_i32_1 = arith.constant 0 : i32
    return %c0_i32, %c0_i32_0 : i32, i32
  }
}

</mosaic_0001>

<llo_original>
// kernel: decoder_forward.1
$region0: #{decoder_forward.1}
  #allocation0 [shape = 'u32[]', space=smem, size = 0x4, offset = 0x4, fixed_abs, tag = 'smem constant byte address 0x4 - core index']
  #allocation1 [shape = 'u32[144,128]{1,0:T(1,128)}', space=vmem, size = 0x12000, scoped, tag = 'internal scratch']
  %s0 = inlined_call_operand.vmem [shape: f32[2,16], index: 0, kind: input, shape index: {}]
  %s1 = inlined_call_operand.vmem [shape: f32[17,32], index: 1, kind: input, shape index: {}]
  %s2 = inlined_call_operand.vmem [shape: f32[258,4], index: 2, kind: input, shape index: {}]
  %s3 = inlined_call_operand.hbm [shape: f32[296,256], index: 3, kind: input, shape index: {}]
  %s4 = inlined_call_operand.vmem [shape: f32[2,256], index: 4, kind: output, shape index: {}]
  %s5 = sld [smem:[#allocation0]]
  $region30: #{decoder_forward.1} parent=0
    _
  %s7 = ssub.s32 1, %s5
  %s8 = scalar_select 0, %s7, %s5
  $region1: #{decoder_forward.1} parent=0
    #allocation2 [shape = 'u8[303104]{0}', space=vmem, size = 0x4a000, scoped, tag = 'input window, operand 3, single buffered']
    #allocation3 [shape = 's32[1]{0}', space=sflag, size = 0x4, scoped, tag = 'scoped memory for decoder_forward.1']
    %9 = vsyncpa [#allocation3], 0
    // Predicated region
    $region2: #{decoder_forward.1} parent=1 // pred_check
      _
    $region3: #{decoder_forward.1} parent=1 // pred_check_branch
      %11 = sbr.rel (0) target = $region5
    $region4: #{decoder_forward.1} parent=1 // pred_region
      _
    $region5: #{decoder_forward.1} parent=1 // pred_fallthru
      _
    // Predicated region
    $region6: #{decoder_forward.1} parent=1 // pred_check
      _
    $region7: #{decoder_forward.1} parent=1 // pred_check_branch
      %13 = sbr.rel (0) target = $region9
    $region8: #{decoder_forward.1} parent=1 // pred_region
      _
    $region9: #{decoder_forward.1} parent=1 // pred_fallthru
      _
    // Predicated region
    $region10: #{decoder_forward.1} parent=1 // pred_check
      _
    $region11: #{decoder_forward.1} parent=1 // pred_check_branch
      %15 = sbr.rel (0) target = $region13
    $region12: #{decoder_forward.1} parent=1 // pred_region
      _
    $region13: #{decoder_forward.1} parent=1 // pred_fallthru
      _
    // Predicated region
    $region14: #{decoder_forward.1} parent=1 // pred_check
      _
    $region15: #{decoder_forward.1} parent=1 // pred_check_branch
      %17 = sbr.rel (0) target = $region17
    $region16: #{decoder_forward.1} parent=1 // pred_region
      %s19 = ssub.s32 9472, 9472
      %20 = vsyncadd [#allocation3], %s19
      %s21 = sshll.u32 [#allocation2], 4
      %s22 = int_to_ptr.vmem [resolvable:$true] %s21
      %27 = dma.hbm_to_vmem [thread:$0]  %s3, 9472, %s22, [#allocation3], 256, 256, 16
    $region17: #{decoder_forward.1} parent=1 // pred_fallthru
      _
    // Predicated region
    $region18: #{decoder_forward.1} parent=1 // pred_check
      _
    $region19: #{decoder_forward.1} parent=1 // pred_check_branch
      %29 = sbr.rel (0) target = $region21
    $region20: #{decoder_forward.1} parent=1 // pred_region
      %30 = dma.done [#allocation3], 9472
    $region21: #{decoder_forward.1} parent=1 // pred_fallthru
      _
    %v31 = vld [vmem:[%s0] sm:$0x3]
    %v32 = vld [vmem:[%s1] sm:$0xff]
    %v33 = vld [vmem:[%s1 + $0x8] sm:$0xff]
    %v34 = vld [vmem:[%s1 + $0x10] sm:$0x1]
    %v35 = vlaneseq
    %v36 = vshrl.u32 %v35, 7
    %v37 = vsub.s32 0, %v36
    %v38 = vrot.slane %v34, %v37
    %vm39 = vcmask 130048
    %v41 = vsel %vm39, %v31, 0
    %43 = vmatprep.subr.mxu0 0.0
    %44 = vmatpush1.msra.mxu0 %v32
    %45 = vmatprep.subr.mxu0 0.0
    %46 = vmatpush1.msra.mxu0 %v33
    %47 = vmatprep.subr.mxu0 0.0
    %48 = vmatpush1.msra.mxu0 0.0
    %49 = vmatprep.subr.mxu0 0.0
    %50 = vmatpush1.msra.mxu0 0.0
    %51 = vmatprep.subr.mxu0 0.0
    %52 = vmatpush1.msra.mxu0 0.0
    %53 = vmatprep.subr.mxu0 0.0
    %54 = vmatpush1.msra.mxu0 0.0
    %55 = vmatprep.subr.mxu0 0.0
    %56 = vmatpush1.msra.mxu0 0.0
    %57 = vmatprep.subr.mxu0 0.0
    %58 = vmatpush1.msra.mxu0 0.0
    %59 = vmatprep.subr.mxu0 0.0
    %60 = vmatpush1.msra.mxu0 0.0
    %61 = vmatprep.subr.mxu0 0.0
    %62 = vmatpush1.msra.mxu0 0.0
    %63 = vmatprep.subr.mxu0 0.0
    %64 = vmatpush1.msra.mxu0 0.0
    %65 = vmatprep.subr.mxu0 0.0
    %66 = vmatpush1.msra.mxu0 0.0
    %67 = vmatprep.subr.mxu0 0.0
    %68 = vmatpush1.msra.mxu0 0.0
    %69 = vmatprep.subr.mxu0 0.0
    %70 = vmatpush1.msra.mxu0 0.0
    %71 = vmatprep.subr.mxu0 0.0
    %72 = vmatpush1.msra.mxu0 0.0
    %73 = vmatprep.subr.mxu0 0.0
    %74 = vmatpush1.msra.mxu0 0.0
    %75 = vmatprep.subr.mxu0 0.0
    %76 = vmatpush1.msra.mxu0 0.0
    %77 = vmatprep.subr.mxu0 0.0
    %78 = vmatpush1.msra.mxu0 0.0
    %79 = vmatprep.subr.mxu0 0.0
    %80 = vmatpush1.msra.mxu0 0.0
    %81 = vmatprep.subr.mxu0 0.0
    %82 = vmatpush1.msra.mxu0 0.0
    %83 = vmatprep.subr.mxu0 0.0
    %84 = vmatpush1.msra.mxu0 0.0
    %85 = vmatprep.subr.mxu0 0.0
    %86 = vmatpush1.msra.mxu0 0.0
    %87 = vmatprep.subr.mxu0 0.0
    %88 = vmatpush1.msra.mxu0 0.0
    %89 = vmatprep.subr.mxu0 0.0
    %90 = vmatpush1.msra.mxu0 0.0
    %91 = vmatprep.subr.mxu0 0.0
    %92 = vmatpush1.msra.mxu0 0.0
    %93 = vmatprep.subr.mxu0 0.0
    %94 = vmatpush1.msra.mxu0 0.0
    %95 = vmatprep.subr.mxu0 0.0
    %96 = vmatpush1.msra.mxu0 0.0
    %97 = vmatprep.subr.mxu0 0.0
    %98 = vmatpush1.msra.mxu0 0.0
    %99 = vmatprep.subr.mxu0 0.0
    %100 = vmatpush1.msra.mxu0 0.0
    %101 = vmatprep.subr.mxu0 0.0
    %102 = vmatpush1.msra.mxu0 0.0
    %103 = vmatprep.subr.mxu0 0.0
    %104 = vmatpush1.msra.mxu0 0.0
    %105 = vmatprep.subr.mxu0 0.0
    %106 = vmatpush1.msra.mxu0 0.0
    %107 = vmatprep.mubr.f32.mxu0 0.0
    %108 = vmatmul.mubr.f32.gmra.mrb[0].mxu0 %v41
    %v109 = vpop.f32.mrb[0].mxu0
    %v110 = vadd.f32 %v38, %v109
    %v111 = vpop.f32.mrb[0].mxu0
    %112 = vdwg.mxu0
    %v113 = vmax.f32 %v110, 0.0
    %v114 = vld [vmem:[#allocation2] sm:$0xff]
    %v115 = vld [vmem:[#allocation2 + $0x8] sm:$0xff]
    %v116 = vld [vmem:[#allocation2 + $0x10] sm:$0xff]
    %v117 = vld [vmem:[#allocation2 + $0x18] sm:$0xff]
    %v118 = vld [vmem:[#allocation2 + $0x20] sm:$0xff]
    %v119 = vld [vmem:[#allocation2 + $0x28] sm:$0xff]
    %v120 = vld [vmem:[#allocation2 + $0x30] sm:$0xff]
    %v121 = vld [vmem:[#allocation2 + $0x38] sm:$0xff]
    %s122 = scalar_lea.vmem [#allocation2], 64
    %v123 = vld [vmem:[%s122] ss:$8 sm:$0x3]
    %v125 = vlaneseq
    %v126 = vshrl.u32 %v125, 7
    %v127 = vsub.s32 0, %v126
    %v128 = vrot.slane %v123, %v127
    %v129 = vlaneseq
    %v130 = vshrl.u32 %v129, 7
    %v131 = vsub.s32 1, %v130
    %v132 = vrot.slane %v123, %v131
    %vm135 = vcmask 261120
    %v137 = vsel %vm135, %v113, 0
    %139 = vmatprep.subr.mxu0 %v115
    %140 = vmatpush1.msra.mxu0 %v114
    %141 = vmatprep.subr.mxu0 %v117
    %142 = vmatpush1.msra.mxu0 %v116
    %143 = vmatprep.subr.mxu0 %v119
    %144 = vmatpush1.msra.mxu0 %v118
    %145 = vmatprep.subr.mxu0 %v121
    %146 = vmatpush1.msra.mxu0 %v120
    %147 = vmatprep.subr.mxu0 0.0
    %148 = vmatpush1.msra.mxu0 0.0
    %149 = vmatprep.subr.mxu0 0.0
    %150 = vmatpush1.msra.mxu0 0.0
    %151 = vmatprep.subr.mxu0 0.0
    %152 = vmatpush1.msra.mxu0 0.0
    %153 = vmatprep.subr.mxu0 0.0
    %154 = vmatpush1.msra.mxu0 0.0
    %155 = vmatprep.subr.mxu0 0.0
    %156 = vmatpush1.msra.mxu0 0.0
    %157 = vmatprep.subr.mxu0 0.0
    %158 = vmatpush1.msra.mxu0 0.0
    %159 = vmatprep.subr.mxu0 0.0
    %160 = vmatpush1.msra.mxu0 0.0
    %161 = vmatprep.subr.mxu0 0.0
    %162 = vmatpush1.msra.mxu0 0.0
    %163 = vmatprep.subr.mxu0 0.0
    %164 = vmatpush1.msra.mxu0 0.0
    %165 = vmatprep.subr.mxu0 0.0
    %166 = vmatpush1.msra.mxu0 0.0
    %167 = vmatprep.subr.mxu0 0.0
    %168 = vmatpush1.msra.mxu0 0.0
    %169 = vmatprep.subr.mxu0 0.0
    %170 = vmatpush1.msra.mxu0 0.0
    %171 = vmatprep.subr.mxu0 0.0
    %172 = vmatpush1.msra.mxu0 0.0
    %173 = vmatprep.subr.mxu0 0.0
    %174 = vmatpush1.msra.mxu0 0.0
    %175 = vmatprep.subr.mxu0 0.0
    %176 = vmatpush1.msra.mxu0 0.0
    %177 = vmatprep.subr.mxu0 0.0
    %178 = vmatpush1.msra.mxu0 0.0
    %179 = vmatprep.subr.mxu0 0.0
    %180 = vmatpush1.msra.mxu0 0.0
    %181 = vmatprep.subr.mxu0 0.0
    %182 = vmatpush1.msra.mxu0 0.0
    %183 = vmatprep.subr.mxu0 0.0
    %184 = vmatpush1.msra.mxu0 0.0
    %185 = vmatprep.subr.mxu0 0.0
    %186 = vmatpush1.msra.mxu0 0.0
    %187 = vmatprep.subr.mxu0 0.0
    %188 = vmatpush1.msra.mxu0 0.0
    %189 = vmatprep.subr.mxu0 0.0
    %190 = vmatpush1.msra.mxu0 0.0
    %191 = vmatprep.subr.mxu0 0.0
    %192 = vmatpush1.msra.mxu0 0.0
    %193 = vmatprep.subr.mxu0 0.0
    %194 = vmatpush1.msra.mxu0 0.0
    %195 = vmatprep.subr.mxu0 0.0
    %196 = vmatpush1.msra.mxu0 0.0
    %197 = vmatprep.subr.mxu0 0.0
    %198 = vmatpush1.msra.mxu0 0.0
    %199 = vmatprep.subr.mxu0 0.0
    %200 = vmatpush1.msra.mxu0 0.0
    %201 = vmatprep.subr.mxu0 0.0
    %202 = vmatpush1.msra.mxu0 0.0
    %203 = vmatprep.mubr.f32.mxu0 0.0
    %204 = vmatmul.mubr.f32.gmra.mrb[0].mxu0 %v137
    %v205 = vpop.f32.mrb[0].mxu0
    %v206 = vadd.f32 %v128, %v205
    %v207 = vpop.f32.mrb[0].mxu0
    %v208 = vadd.f32 %v132, %v207
    %209 = vdwg.mxu0
    %v210 = vmul.f32 %v206, %v206
    %v211 = vmul.f32 %v208, %v208
    %v214 = vrot.slane %v210, 6
    %v215 = vrot.slane %v211, 6
    %vm218 = vcmask 1041408
    %v219 = vsel %vm218, %v206, %v214
    %v220 = vsel %vm218, %v208, %v215
    %v221 = vld [vmem:[%s2] sm:$0xff]
    %v222 = vld [vmem:[%s2 + $0x8] sm:$0xff]
    %v223 = vld [vmem:[%s2 + $0x10] sm:$0xff]
    %v224 = vld [vmem:[%s2 + $0x18] sm:$0xff]
    %v225 = vld [vmem:[%s2 + $0x20] sm:$0xff]
    %v226 = vld [vmem:[%s2 + $0x28] sm:$0xff]
    %v227 = vld [vmem:[%s2 + $0x30] sm:$0xff]
    %v228 = vld [vmem:[%s2 + $0x38] sm:$0xff]
    %v229 = vld [vmem:[%s2 + $0x40] sm:$0xff]
    %v230 = vld [vmem:[%s2 + $0x48] sm:$0xff]
    %v231 = vld [vmem:[%s2 + $0x50] sm:$0xff]
    %v232 = vld [vmem:[%s2 + $0x58] sm:$0xff]
    %v233 = vld [vmem:[%s2 + $0x60] sm:$0xff]
    %v234 = vld [vmem:[%s2 + $0x68] sm:$0xff]
    %v235 = vld [vmem:[%s2 + $0x70] sm:$0xff]
    %v236 = vld [vmem:[%s2 + $0x78] sm:$0xff]
    %v237 = vld [vmem:[%s2 + $0x80] sm:$0xff]
    %v238 = vld [vmem:[%s2 + $0x88] sm:$0xff]
    %v239 = vld [vmem:[%s2 + $0x90] sm:$0xff]
    %v240 = vld [vmem:[%s2 + $0x98] sm:$0xff]
    %v241 = vld [vmem:[%s2 + $0xa0] sm:$0xff]
    %v242 = vld [vmem:[%s2 + $0xa8] sm:$0xff]
    %v243 = vld [vmem:[%s2 + $0xb0] sm:$0xff]
    %v244 = vld [vmem:[%s2 + $0xb8] sm:$0xff]
    %v245 = vld [vmem:[%s2 + $0xc0] sm:$0xff]
    %v246 = vld [vmem:[%s2 + $0xc8] sm:$0xff]
    %v247 = vld [vmem:[%s2 + $0xd0] sm:$0xff]
    %v248 = vld [vmem:[%s2 + $0xd8] sm:$0xff]
    %v249 = vld [vmem:[%s2 + $0xe0] sm:$0xff]
    %v250 = vld [vmem:[%s2 + $0xe8] sm:$0xff]
    %v251 = vld [vmem:[%s2 + $0xf0] sm:$0xff]
    %v252 = vld [vmem:[%s2 + $0xf8] sm:$0xff]
    %253 = vmatprep.subr.mxu0 0.0
    %254 = vmatpush1.msra.mxu0 %v221
    %255 = vmatprep.subr.mxu0 0.0
    %256 = vmatpush1.msra.mxu0 %v222
    %257 = vmatprep.subr.mxu0 0.0
    %258 = vmatpush1.msra.mxu0 %v223
    %259 = vmatprep.subr.mxu0 0.0
    %260 = vmatpush1.msra.mxu0 %v224
    %261 = vmatprep.subr.mxu0 0.0
    %262 = vmatpush1.msra.mxu0 %v225
    %263 = vmatprep.subr.mxu0 0.0
    %264 = vmatpush1.msra.mxu0 %v226
    %265 = vmatprep.subr.mxu0 0.0
    %266 = vmatpush1.msra.mxu0 %v227
    %267 = vmatprep.subr.mxu0 0.0
    %268 = vmatpush1.msra.mxu0 %v228
    %269 = vmatprep.subr.mxu0 0.0
    %270 = vmatpush1.msra.mxu0 %v229
    %271 = vmatprep.subr.mxu0 0.0
    %272 = vmatpush1.msra.mxu0 %v230
    %273 = vmatprep.subr.mxu0 0.0
    %274 = vmatpush1.msra.mxu0 %v231
    %275 = vmatprep.subr.mxu0 0.0
    %276 = vmatpush1.msra.mxu0 %v232
    %277 = vmatprep.subr.mxu0 0.0
    %278 = vmatpush1.msra.mxu0 %v233
    %279 = vmatprep.subr.mxu0 0.0
    %280 = vmatpush1.msra.mxu0 %v234
    %281 = vmatprep.subr.mxu0 0.0
    %282 = vmatpush1.msra.mxu0 %v235
    %283 = vmatprep.subr.mxu0 0.0
    %284 = vmatpush1.msra.mxu0 %v236
    %285 = vmatprep.subr.mxu0 0.0
    %286 = vmatpush1.msra.mxu0 %v237
    %287 = vmatprep.subr.mxu0 0.0
    %288 = vmatpush1.msra.mxu0 %v238
    %289 = vmatprep.subr.mxu0 0.0
    %290 = vmatpush1.msra.mxu0 %v239
    %291 = vmatprep.subr.mxu0 0.0
    %292 = vmatpush1.msra.mxu0 %v240
    %293 = vmatprep.subr.mxu0 0.0
    %294 = vmatpush1.msra.mxu0 %v241
    %295 = vmatprep.subr.mxu0 0.0
    %296 = vmatpush1.msra.mxu0 %v242
    %297 = vmatprep.subr.mxu0 0.0
    %298 = vmatpush1.msra.mxu0 %v243
    %299 = vmatprep.subr.mxu0 0.0
    %300 = vmatpush1.msra.mxu0 %v244
    %301 = vmatprep.subr.mxu0 0.0
    %302 = vmatpush1.msra.mxu0 %v245
    %303 = vmatprep.subr.mxu0 0.0
    %304 = vmatpush1.msra.mxu0 %v246
    %305 = vmatprep.subr.mxu0 0.0
    %306 = vmatpush1.msra.mxu0 %v247
    %307 = vmatprep.subr.mxu0 0.0
    %308 = vmatpush1.msra.mxu0 %v248
    %309 = vmatprep.subr.mxu0 0.0
    %310 = vmatpush1.msra.mxu0 %v249
    %311 = vmatprep.subr.mxu0 0.0
    %312 = vmatpush1.msra.mxu0 %v250
    %313 = vmatprep.subr.mxu0 0.0
    %314 = vmatpush1.msra.mxu0 %v251
    %315 = vmatprep.subr.mxu0 0.0
    %316 = vmatpush1.msra.mxu0 %v252
    %317 = vmatprep.mubr.f32.mxu0 %v220
    %318 = vmatmul.mubr.f32.gmra.mrb[0].mxu0 %v219
    %v319 = vpop.f32.mrb[0].mxu0
    %v320 = vadd.f32 0.0, %v319
    %v321 = vpop.f32.mrb[0].mxu0
    %322 = vdwg.mxu0
    %vm323 = vcmask 25600
    %v324 = vsel %vm323, %v320, 0.0
    %v325 = vrot.slane %v324, 4
    %v326 = vadd.f32 %v324, %v325
    %v327 = vrot.slane %v326, 2
    %v328 = vadd.f32 %v326, %v327
    %v329 = vrot.slane %v328, 1
    %v330 = vadd.f32 %v328, %v329
    %v331 = vmul.f32 %v330, 0.0078125
    %v333 = vrot.slane %v320, 2
    %v335 = vsel %vm323, %v333, 0.0
    %v336 = vrot.slane %v335, 4
    %v337 = vadd.f32 %v335, %v336
    %v338 = vrot.slane %v337, 2
    %v339 = vadd.f32 %v337, %v338
    %v340 = vrot.slane %v339, 1
    %v341 = vadd.f32 %v339, %v340
    %v342 = vmul.f32 %v341, 0.0078125
    %v343 = vmul.f32 %v331, %v331
    %v344 = vsub.f32 %v342, %v343
    %v345 = vadd.f32 %v344, 1e-05
    %v346 = vrsqrt.pop %v345
    %v347 = vld [vmem:[%s2 + $0x100] sm:$0x1]
    %v348 = vld [vmem:[%s2 + $0x101] sm:$0x1]
    %v349 = vmul.f32 %v347, %v346
    %v350 = vmul.f32 %v331, %v349
    %v351 = vsub.f32 %v348, %v350
    %v353 = vrot.slane %v351, 7
    %vm355 = vcmask 1040384
    %v356 = vsel %vm355, %v349, %v353
    %v357 = vld [vmem:[#allocation2 + $0x40] sm:$0x3c]
    %v358 = vld [vmem:[#allocation2 + $0x48] sm:$0x3c]
    %v361 = vrot.slane %v357, 2
    %v362 = vrot.slane %v358, 2
    %vm363 = vcmask 31744
    %v365 = vsel %vm363, %v356, 0
    %vm367 = vcmask 1043456
    %v368 = vsel %vm367, %v361, 0
    %v370 = vsel %vm367, %v362, 0
    %372 = vmatprep.subr.mxu0 %v370
    %373 = vmatpush1.msra.mxu0 %v368
    %374 = vmatprep.subr.mxu0 0.0
    %375 = vmatpush1.msra.mxu0 0.0
    %376 = vmatprep.subr.mxu0 0.0
    %377 = vmatpush1.msra.mxu0 0.0
    %378 = vmatprep.subr.mxu0 0.0
    %379 = vmatpush1.msra.mxu0 0.0
    %380 = vmatprep.subr.mxu0 0.0
    %381 = vmatpush1.msra.mxu0 0.0
    %382 = vmatprep.subr.mxu0 0.0
    %383 = vmatpush1.msra.mxu0 0.0
    %384 = vmatprep.subr.mxu0 0.0
    %385 = vmatpush1.msra.mxu0 0.0
    %386 = vmatprep.subr.mxu0 0.0
    %387 = vmatpush1.msra.mxu0 0.0
    %388 = vmatprep.subr.mxu0 0.0
    %389 = vmatpush1.msra.mxu0 0.0
    %390 = vmatprep.subr.mxu0 0.0
    %391 = vmatpush1.msra.mxu0 0.0
    %392 = vmatprep.subr.mxu0 0.0
    %393 = vmatpush1.msra.mxu0 0.0
    %394 = vmatprep.subr.mxu0 0.0
    %395 = vmatpush1.msra.mxu0 0.0
    %396 = vmatprep.subr.mxu0 0.0
    %397 = vmatpush1.msra.mxu0 0.0
    %398 = vmatprep.subr.mxu0 0.0
    %399 = vmatpush1.msra.mxu0 0.0
    %400 = vmatprep.subr.mxu0 0.0
    %401 = vmatpush1.msra.mxu0 0.0
    %402 = vmatprep.subr.mxu0 0.0
    %403 = vmatpush1.msra.mxu0 0.0
    %404 = vmatprep.subr.mxu0 0.0
    %405 = vmatpush1.msra.mxu0 0.0
    %406 = vmatprep.subr.mxu0 0.0
    %407 = vmatpush1.msra.mxu0 0.0
    %408 = vmatprep.subr.mxu0 0.0
    %409 = vmatpush1.msra.mxu0 0.0
    %410 = vmatprep.subr.mxu0 0.0
    %411 = vmatpush1.msra.mxu0 0.0
    %412 = vmatprep.subr.mxu0 0.0
    %413 = vmatpush1.msra.mxu0 0.0
    %414 = vmatprep.subr.mxu0 0.0
    %415 = vmatpush1.msra.mxu0 0.0
    %416 = vmatprep.subr.mxu0 0.0
    %417 = vmatpush1.msra.mxu0 0.0
    %418 = vmatprep.subr.mxu0 0.0
    %419 = vmatpush1.msra.mxu0 0.0
    %420 = vmatprep.subr.mxu0 0.0
    %421 = vmatpush1.msra.mxu0 0.0
    %422 = vmatprep.subr.mxu0 0.0
    %423 = vmatpush1.msra.mxu0 0.0
    %424 = vmatprep.subr.mxu0 0.0
    %425 = vmatpush1.msra.mxu0 0.0
    %426 = vmatprep.subr.mxu0 0.0
    %427 = vmatpush1.msra.mxu0 0.0
    %428 = vmatprep.subr.mxu0 0.0
    %429 = vmatpush1.msra.mxu0 0.0
    %430 = vmatprep.subr.mxu0 0.0
    %431 = vmatpush1.msra.mxu0 0.0
    %432 = vmatprep.subr.mxu0 0.0
    %433 = vmatpush1.msra.mxu0 0.0
    %434 = vmatprep.subr.mxu0 0.0
    %435 = vmatpush1.msra.mxu0 0.0
    %436 = vmatprep.mubr.f32.mxu0 0.0
    %437 = vmatmul.mubr.f32.gmra.mrb[0].mxu0 %v365
    %v438 = vpop.f32.mrb[0].mxu0
    %v439 = vadd.f32 0.0, %v438
    %v440 = vpop.f32.mrb[0].mxu0
    %v441 = vadd.f32 0.0, %v440
    %442 = vdwg.mxu0
    %v443 = vlaneseq
    %v444 = vshrl.u32 %v443, 7
    %v445 = vsub.s32 0, %v444
    %v446 = vrot.slane %v439, %v445
    %v447 = vlaneseq
    %v448 = vshrl.u32 %v447, 7
    %v449 = vsub.s32 0, %v448
    %v450 = vrot.slane %v441, %v449
    %v451 = vmul.f32 %v206, %v446
    %v452 = vmul.f32 %v208, %v450
    %v453 = vlaneseq
    %v454 = vshrl.u32 %v453, 7
    %v455 = vsub.s32 1, %v454
    %v456 = vrot.slane %v439, %v455
    %v457 = vlaneseq
    %v458 = vshrl.u32 %v457, 7
    %v459 = vsub.s32 1, %v458
    %v460 = vrot.slane %v441, %v459
    %v461 = vadd.f32 %v451, %v456
    %v462 = vadd.f32 %v452, %v460
    %v463 = vmax.f32 %v461, 0.0
    %v464 = vmax.f32 %v462, 0.0
    %v465 = vld [vmem:[#allocation2 + $0x50] sm:$0xff]
    %v466 = vld [vmem:[#allocation2 + $0x58] sm:$0xff]
    %v467 = vld [vmem:[#allocation2 + $0x60] sm:$0xff]
    %v468 = vld [vmem:[#allocation2 + $0x68] sm:$0xff]
    %v469 = vld [vmem:[#allocation2 + $0x70] sm:$0xff]
    %v470 = vld [vmem:[#allocation2 + $0x78] sm:$0xff]
    %v471 = vld [vmem:[#allocation2 + $0x80] sm:$0xff]
    %v472 = vld [vmem:[#allocation2 + $0x88] sm:$0xff]
    %v473 = vld [vmem:[#allocation2 + $0x90] sm:$0xff]
    %v474 = vld [vmem:[#allocation2 + $0x98] sm:$0xff]
    %v475 = vld [vmem:[#allocation2 + $0xa0] sm:$0xff]
    %v476 = vld [vmem:[#allocation2 + $0xa8] sm:$0xff]
    %v477 = vld [vmem:[#allocation2 + $0xb0] sm:$0xff]
    %v478 = vld [vmem:[#allocation2 + $0xb8] sm:$0xff]
    %v479 = vld [vmem:[#allocation2 + $0xc0] sm:$0xff]
    %v480 = vld [vmem:[#allocation2 + $0xc8] sm:$0xff]
    %v481 = vld [vmem:[#allocation2 + $0xd0] sm:$0xff]
    %v482 = vld [vmem:[#allocation2 + $0xd8] sm:$0xff]
    %v483 = vld [vmem:[#allocation2 + $0xe0] sm:$0xff]
    %v484 = vld [vmem:[#allocation2 + $0xe8] sm:$0xff]
    %v485 = vld [vmem:[#allocation2 + $0xf0] sm:$0xff]
    %v486 = vld [vmem:[#allocation2 + $0xf8] sm:$0xff]
    %v487 = vld [vmem:[#allocation2 + $0x100] sm:$0xff]
    %v488 = vld [vmem:[#allocation2 + $0x108] sm:$0xff]
    %v489 = vld [vmem:[#allocation2 + $0x110] sm:$0xff]
    %v490 = vld [vmem:[#allocation2 + $0x118] sm:$0xff]
    %v491 = vld [vmem:[#allocation2 + $0x120] sm:$0xff]
    %v492 = vld [vmem:[#allocation2 + $0x128] sm:$0xff]
    %v493 = vld [vmem:[#allocation2 + $0x130] sm:$0xff]
    %v494 = vld [vmem:[#allocation2 + $0x138] sm:$0xff]
    %v495 = vld [vmem:[#allocation2 + $0x140] sm:$0xff]
    %v496 = vld [vmem:[#allocation2 + $0x148] sm:$0xff]
    %v497 = vld [vmem:[#allocation2 + $0x150] sm:$0xff]
    %v498 = vld [vmem:[#allocation2 + $0x158] sm:$0xff]
    %v499 = vld [vmem:[#allocation2 + $0x160] sm:$0xff]
    %v500 = vld [vmem:[#allocation2 + $0x168] sm:$0xff]
    %v501 = vld [vmem:[#allocation2 + $0x170] sm:$0xff]
    %v502 = vld [vmem:[#allocation2 + $0x178] sm:$0xff]
    %v503 = vld [vmem:[#allocation2 + $0x180] sm:$0xff]
    %v504 = vld [vmem:[#allocation2 + $0x188] sm:$0xff]
    %v505 = vld [vmem:[#allocation2 + $0x190] sm:$0xff]
    %v506 = vld [vmem:[#allocation2 + $0x198] sm:$0xff]
    %v507 = vld [vmem:[#allocation2 + $0x1a0] sm:$0xff]
    %v508 = vld [vmem:[#allocation2 + $0x1a8] sm:$0xff]
    %v509 = vld [vmem:[#allocation2 + $0x1b0] sm:$0xff]
    %v510 = vld [vmem:[#allocation2 + $0x1b8] sm:$0xff]
    %v511 = vld [vmem:[#allocation2 + $0x1c0] sm:$0xff]
    %v512 = vld [vmem:[#allocation2 + $0x1c8] sm:$0xff]
    %v513 = vld [vmem:[#allocation2 + $0x1d0] sm:$0xff]
    %v514 = vld [vmem:[#allocation2 + $0x1d8] sm:$0xff]
    %v515 = vld [vmem:[#allocation2 + $0x1e0] sm:$0xff]
    %v516 = vld [vmem:[#allocation2 + $0x1e8] sm:$0xff]
    %v517 = vld [vmem:[#allocation2 + $0x1f0] sm:$0xff]
    %v518 = vld [vmem:[#allocation2 + $0x1f8] sm:$0xff]
    %v519 = vld [vmem:[#allocation2 + $0x200] sm:$0xff]
    %v520 = vld [vmem:[#allocation2 + $0x208] sm:$0xff]
    %v521 = vld [vmem:[#allocation2 + $0x210] sm:$0xff]
    %v522 = vld [vmem:[#allocation2 + $0x218] sm:$0xff]
    %v523 = vld [vmem:[#allocation2 + $0x220] sm:$0xff]
    %v524 = vld [vmem:[#allocation2 + $0x228] sm:$0xff]
    %v525 = vld [vmem:[#allocation2 + $0x230] sm:$0xff]
    %v526 = vld [vmem:[#allocation2 + $0x238] sm:$0xff]
    %v527 = vld [vmem:[#allocation2 + $0x240] sm:$0xff]
    %v528 = vld [vmem:[#allocation2 + $0x248] sm:$0xff]
    %s529 = scalar_lea.vmem [#allocation2], 65
    %v530 = vld [vmem:[%s529] ss:$8 sm:$0x3]
    %v532 = vlaneseq
    %v533 = vshrl.u32 %v532, 7
    %v534 = vsub.s32 0, %v533
    %v535 = vrot.slane %v530, %v534
    %v536 = vlaneseq
    %v537 = vshrl.u32 %v536, 7
    %v538 = vsub.s32 1, %v537
    %v539 = vrot.slane %v530, %v538
    %542 = vmatprep.subr.mxu0 %v466
    %543 = vmatpush1.msra.mxu0 %v465
    %544 = vmatprep.subr.mxu0 %v468
    %545 = vmatpush1.msra.mxu0 %v467
    %546 = vmatprep.subr.mxu0 %v470
    %547 = vmatpush1.msra.mxu0 %v469
    %548 = vmatprep.subr.mxu0 %v472
    %549 = vmatpush1.msra.mxu0 %v471
    %550 = vmatprep.subr.mxu0 %v474
    %551 = vmatpush1.msra.mxu0 %v473
    %552 = vmatprep.subr.mxu0 %v476
    %553 = vmatpush1.msra.mxu0 %v475
    %554 = vmatprep.subr.mxu0 %v478
    %555 = vmatpush1.msra.mxu0 %v477
    %556 = vmatprep.subr.mxu0 %v480
    %557 = vmatpush1.msra.mxu0 %v479
    %558 = vmatprep.subr.mxu0 %v482
    %559 = vmatpush1.msra.mxu0 %v481
    %560 = vmatprep.subr.mxu0 %v484
    %561 = vmatpush1.msra.mxu0 %v483
    %562 = vmatprep.subr.mxu0 %v486
    %563 = vmatpush1.msra.mxu0 %v485
    %564 = vmatprep.subr.mxu0 %v488
    %565 = vmatpush1.msra.mxu0 %v487
    %566 = vmatprep.subr.mxu0 %v490
    %567 = vmatpush1.msra.mxu0 %v489
    %568 = vmatprep.subr.mxu0 %v492
    %569 = vmatpush1.msra.mxu0 %v491
    %570 = vmatprep.subr.mxu0 %v494
    %571 = vmatpush1.msra.mxu0 %v493
    %572 = vmatprep.subr.mxu0 %v496
    %573 = vmatpush1.msra.mxu0 %v495
    %574 = vmatprep.subr.mxu0 %v498
    %575 = vmatpush1.msra.mxu0 %v497
    %576 = vmatprep.subr.mxu0 %v500
    %577 = vmatpush1.msra.mxu0 %v499
    %578 = vmatprep.subr.mxu0 %v502
    %579 = vmatpush1.msra.mxu0 %v501
    %580 = vmatprep.subr.mxu0 %v504
    %581 = vmatpush1.msra.mxu0 %v503
    %582 = vmatprep.subr.mxu0 %v506
    %583 = vmatpush1.msra.mxu0 %v505
    %584 = vmatprep.subr.mxu0 %v508
    %585 = vmatpush1.msra.mxu0 %v507
    %586 = vmatprep.subr.mxu0 %v510
    %587 = vmatpush1.msra.mxu0 %v509
    %588 = vmatprep.subr.mxu0 %v512
    %589 = vmatpush1.msra.mxu0 %v511
    %590 = vmatprep.subr.mxu0 %v514
    %591 = vmatpush1.msra.mxu0 %v513
    %592 = vmatprep.subr.mxu0 %v516
    %593 = vmatpush1.msra.mxu0 %v515
    %594 = vmatprep.subr.mxu0 %v518
    %595 = vmatpush1.msra.mxu0 %v517
    %596 = vmatprep.subr.mxu0 %v520
    %597 = vmatpush1.msra.mxu0 %v519
    %598 = vmatprep.subr.mxu0 %v522
    %599 = vmatpush1.msra.mxu0 %v521
    %600 = vmatprep.subr.mxu0 %v524
    %601 = vmatpush1.msra.mxu0 %v523
    %602 = vmatprep.subr.mxu0 %v526
    %603 = vmatpush1.msra.mxu0 %v525
    %604 = vmatprep.subr.mxu0 %v528
    %605 = vmatpush1.msra.mxu0 %v527
    %606 = vmatprep.mubr.f32.mxu0 %v464
    %607 = vmatmul.mubr.f32.gmra.mrb[0].mxu0 %v463
    %v608 = vpop.f32.mrb[0].mxu0
    %v609 = vadd.f32 %v535, %v608
    %v610 = vpop.f32.mrb[0].mxu0
    %v611 = vadd.f32 %v539, %v610
    %612 = vdwg.mxu0
    %v613 = vmul.f32 %v609, 0.5
    %v614 = vmul.f32 %v611, 0.5
    %v615 = vtanh.pop %v613
    %v616 = vtanh.pop %v614
    %v617 = vmul.f32 %v615, 0.5
    %v618 = vmul.f32 %v616, 0.5
    %v619 = vadd.f32 %v617, 0.5
    %v620 = vadd.f32 %v618, 0.5
    %v623 = vcombine.low %v619, %v620
    %v625 = vunpack.c.l.s4 1983009808
    %v626 = vunpack.c.0.s8 %v625
    %v627 = vlaneseq
    %v628 = vshrl.u32 %v627, 7
    %v629 = vsub.s32 %v626, %v628
    %v630 = vrot.slane %v623, %v629
    %632 = vst [vmem:[%s4] sm:$0xf] %v630
    // Predicated region
    $region22: #{decoder_forward.1} parent=1 // pred_check
      _
    $region23: #{decoder_forward.1} parent=1 // pred_check_branch
      %634 = sbr.rel (0) target = $region25
    $region24: #{decoder_forward.1} parent=1 // pred_region
      _
    $region25: #{decoder_forward.1} parent=1 // pred_fallthru
      _
    // Predicated region
    $region26: #{decoder_forward.1} parent=1 // pred_check
      _
    $region27: #{decoder_forward.1} parent=1 // pred_check_branch
      %636 = sbr.rel (0) target = $region29
    $region28: #{decoder_forward.1} parent=1 // pred_region
      _
    $region29: #{decoder_forward.1} parent=1 // pred_fallthru
      _
    %637 = vsyncpa [#allocation3], 1

</llo_original>
